<compile_context>
chip_gen: v7x
topology: tpu7x:2x2x1
jax: 0.10.0
libtpu: 0.0.40
codegen_flags: <defaults>
</compile_context>

<pallas_src>
import functools

import jax
import jax.numpy as jnp
from jax import lax
from jax.experimental import pallas as pl
from jax.experimental.pallas import tpu as pltpu


def _round_up(x, m):
    return ((x + m - 1) // m) * m


def _pad_channel_dim(c):
    c128 = _round_up(c, 128)
    if c128 <= int(1.25 * c):
        return c128            # cheap to make fully lane-dense
    return _round_up(c, 8)     # bound HBM inflation for small channel counts


def _vmem_capacity_bytes():
    try:
        cap = getattr(pltpu.get_tpu_info(), "vmem_capacity_bytes", None)
        if cap:
            return int(cap)
    except Exception:
        pass
    try:
        kind = jax.devices()[0].device_kind.lower()
    except Exception:
        kind = ""
    if "v7" in kind or "7x" in kind:
        return 64 << 20
    return 128 << 20


def _supports_bf16_eup():
    # v6e / v7x have bf16 EUP+VPU; v5e and older do not.
    try:
        kind = jax.devices()[0].device_kind.lower()
    except Exception:
        return False
    return not any(v in kind for v in ("v2", "v3", "v4", "v5"))


def _vmem_bytes_estimate(tq, cx, cip, npp):
    dbuf = 2 * (tq * cx * 2 + tq * cx * 4)        # x tile (bf16) + out tile (f32), 2-deep
    resident = (2 * npp * cip * 2                 # phi^T + g (bf16), single-buffered
                + 2 * cx * cip * 2                # theta / W weights (bf16)
                + (cip + cx) * 4)                 # biases (f32)
    temps = (tq * npp * (4 + 2)                   # f (f32) + p (<= f32)
             + tq * cip * (4 + 2 + 4)             # theta f32/bf16 + y f32
             + tq * cx * 4)                       # wy f32
    return dbuf + resident + temps


# ---------------------------------------------------------------------------
# Pallas kernel: one (batch, query-tile) block per grid step.
# ---------------------------------------------------------------------------
def _nonlocal_kernel(x_ref, phiT_ref, g_ref, wth_ref, bth_ref, ww_ref, bw_ref,
                     out_ref, *, n_keys, n_keys_padded, exp_dtype):
    x_bf = x_ref[0]                                            # (TQ, Cx) bf16

    # theta 1x1 conv as matmul: (TQ, Cx) @ (Cx, Cip) + b, f32 accumulate
    theta = jnp.dot(x_bf, wth_ref[...],
                    preferred_element_type=jnp.float32) + bth_ref[...]

    # attention logits: theta @ phi^T (phi pre-transposed in XLA -> plain NN dot)
    f = jnp.dot(theta.astype(jnp.bfloat16), phiT_ref[0],
                preferred_element_type=jnp.float32)            # (TQ, Npp)

    # mask padded keys (static check: only emitted when Npp != Np)
    if n_keys_padded != n_keys:
        key_ids = lax.broadcasted_iota(jnp.int32, (1, n_keys_padded), 1)
        f = jnp.where(key_ids < n_keys, f, jnp.float32(-1e30))

    # numerically stable softmax; normalisation deferred past the PV matmul
    # TODO(synk): for very large Np (TQ*Np logits exceeding the VMEM budget),
    # stream the key axis in chunks with an online (flash-style) softmax.
    m = jnp.max(f, axis=-1, keepdims=True)
    p = jnp.exp((f - m).astype(exp_dtype))                     # bf16 exp on v6e/v7x
    denom = jnp.sum(p.astype(jnp.float32), axis=-1, keepdims=True)

    # y = p @ g, then normalise the (much smaller) TQ x Cip result
    y = jnp.dot(p.astype(jnp.bfloat16), g_ref[0],
                preferred_element_type=jnp.float32)            # (TQ, Cip)
    y = y * pl.reciprocal(denom, approx=True)

    # W 1x1 conv (BatchNorm already folded into ww/bw) + residual add in f32
    wy = jnp.dot(y.astype(jnp.bfloat16), ww_ref[...],
                 preferred_element_type=jnp.float32) + bw_ref[...]
    out_ref[0] = (wy + x_bf.astype(jnp.float32)).astype(out_ref.dtype)


# ---------------------------------------------------------------------------
# Parameters (PyTorch-equivalent layout) and XLA glue
# ---------------------------------------------------------------------------
def init_params(key, in_channels):
    inter = in_channels // 2
    if inter == 0:
        inter = 1
    ks = jax.random.split(key, 8)

    def u(k, shape, fan_in):
        bound = 1.0 / jnp.sqrt(jnp.float32(fan_in))
        return jax.random.uniform(k, shape, jnp.float32, -bound, bound)

    return dict(
        w_g=u(ks[0], (inter, in_channels), in_channels),
        b_g=u(ks[1], (inter,), in_channels),
        w_theta=u(ks[2], (inter, in_channels), in_channels),
        b_theta=u(ks[3], (inter,), in_channels),
        w_phi=u(ks[4], (inter, in_channels), in_channels),
        b_phi=u(ks[5], (inter,), in_channels),
        w_W=u(ks[6], (in_channels, inter), inter),
        b_W=u(ks[7], (in_channels,), inter),
        # BatchNorm2d: module init sets weight=0, bias=0; running stats 0 / 1.
        bn_gamma=jnp.zeros((in_channels,), jnp.float32),
        bn_beta=jnp.zeros((in_channels,), jnp.float32),
        bn_mean=jnp.zeros((in_channels,), jnp.float32),
        bn_var=jnp.ones((in_channels,), jnp.float32),
    )


def _conv1x1_nhwc(x_nhwc, w, b):        # w: (Cout, Cin), b: (Cout,)
    return jnp.einsum('bhwc,oc->bhwo', x_nhwc, w) + b


def _maxpool2x2_nhwc(t):
    B, H, W, C = t.shape
    t = t[:, :(H // 2) * 2, :(W // 2) * 2, :]
    return t.reshape(B, H // 2, 2, W // 2, 2, C).max(axis=(2, 4))


@jax.jit
def nonlocal_block(x, params):
    B, C, H, W = x.shape
    Cint = params["w_theta"].shape[0]
    HW = H * W
    Np = (H // 2) * (W // 2)

    Cx = _pad_channel_dim(C)
    Cip = _pad_channel_dim(Cint)
    Npp = _round_up(Np, 128)       # lane-dense logits / phi^T; masked in-kernel

    # ---- glue (XLA, channels-last): g / phi projection + 2x2 maxpool ----
    x_nhwc = jnp.transpose(x, (0, 2, 3, 1))                    # (B, H, W, C)
    g_pool = _maxpool2x2_nhwc(_conv1x1_nhwc(x_nhwc, params["w_g"], params["b_g"]))
    phi_pool = _maxpool2x2_nhwc(_conv1x1_nhwc(x_nhwc, params["w_phi"], params["b_phi"]))
    g_x = jnp.pad(g_pool.reshape(B, Np, Cint),
                  ((0, 0), (0, Npp - Np), (0, Cip - Cint))).astype(jnp.bfloat16)
    phi_flat = jnp.pad(phi_pool.reshape(B, Np, Cint),
                       ((0, 0), (0, Npp - Np), (0, Cip - Cint)))
    phiT = jnp.transpose(phi_flat, (0, 2, 1)).astype(jnp.bfloat16)   # (B, Cip, Npp)

    # ---- query tiling: divisor-aware, >=4 total grid steps, VMEM-aware ----
    budget = int(0.75 * _vmem_capacity_bytes())
    n_q = max(1, pl.cdiv(HW, 512))
    while B * n_q < 4 and pl.cdiv(HW, n_q + 1) >= 8:
        n_q += 1                                   # keep both v7x TCs busy
    TQ = _round_up(pl.cdiv(HW, n_q), 8)
    while TQ > 128 and _vmem_bytes_estimate(TQ, Cx, Cip, Npp) > budget:
        n_q += 1
        TQ = _round_up(pl.cdiv(HW, n_q), 8)
    HWp = _round_up(HW, TQ)

    # ---- x: bf16 in HBM (halves the per-tile input DMA) ----
    x_flat = x_nhwc.reshape(B, HW, C)
    x_flat = jnp.pad(x_flat, ((0, 0), (0, HWp - HW), (0, Cx - C))).astype(jnp.bfloat16)

    # ---- weight prep: transpose, pad, fold BatchNorm into W, cast bf16 ----
    wth = jnp.pad(params["w_theta"].T,
                  ((0, Cx - C), (0, Cip - Cint))).astype(jnp.bfloat16)    # (Cx, Cip)
    bth = jnp.pad(params["b_theta"], (0, Cip - Cint))[None, :]            # (1, Cip)

    scale = params["bn_gamma"] * lax.rsqrt(params["bn_var"] + 1e-5)       # (C,)
    ww_f = params["w_W"] * scale[:, None]                                 # (C, Cint)
    bw_f = (params["b_W"] - params["bn_mean"]) * scale + params["bn_beta"]
    ww = jnp.pad(ww_f.T, ((0, Cip - Cint), (0, Cx - C))).astype(jnp.bfloat16)  # (Cip, Cx)
    bw = jnp.pad(bw_f, (0, Cx - C))[None, :]                              # (1, Cx)

    est = _vmem_bytes_estimate(TQ, Cx, Cip, Npp)
    vmem_limit = int(min(budget, max(32 << 20, int(1.3 * est) + (2 << 20))))

    kernel = functools.partial(
        _nonlocal_kernel, n_keys=Np, n_keys_padded=Npp,
        exp_dtype=jnp.bfloat16 if _supports_bf16_eup() else jnp.float32)

    out = pl.pallas_call(
        kernel,
        out_shape=jax.ShapeDtypeStruct((B, HWp, Cx), jnp.float32),
        grid=(B, HWp // TQ),
        in_specs=[
            pl.BlockSpec((1, TQ, Cx), lambda b, q: (b, q, 0)),            # x tile
            pl.BlockSpec((1, Cip, Npp), lambda b, q: (b, 0, 0),
                         pipeline_mode=pl.Buffered(1)),                   # phi^T (resident)
            pl.BlockSpec((1, Npp, Cip), lambda b, q: (b, 0, 0),
                         pipeline_mode=pl.Buffered(1)),                   # g (resident)
            pl.BlockSpec((Cx, Cip), lambda b, q: (0, 0),
                         pipeline_mode=pl.Buffered(1)),                   # w_theta^T
            pl.BlockSpec((1, Cip), lambda b, q: (0, 0),
                         pipeline_mode=pl.Buffered(1)),                   # b_theta
            pl.BlockSpec((Cip, Cx), lambda b, q: (0, 0),
                         pipeline_mode=pl.Buffered(1)),                   # W (BN folded)
            pl.BlockSpec((1, Cx), lambda b, q: (0, 0),
                         pipeline_mode=pl.Buffered(1)),                   # b_W (BN folded)
        ],
        out_specs=pl.BlockSpec((1, TQ, Cx), lambda b, q: (b, q, 0)),
        compiler_params=pltpu.CompilerParams(
            dimension_semantics=("parallel", "parallel"),
            vmem_limit_bytes=vmem_limit,
        ),
    )(x_flat, phiT, g_x, wth, bth, ww, bw)

    # strip padding, back to NCHW
    out = out[:, :HW, :C].reshape(B, H, W, C)
    return jnp.transpose(out, (0, 3, 1, 2))


# ---------------------------------------------------------------------------
# Pure-JAX f32 reference (mirrors the PyTorch forward) for correctness checks
# ---------------------------------------------------------------------------
def nonlocal_block_reference(x, params):
    B, C, H, W = x.shape
    Cint = params["w_theta"].shape[0]

    def conv1x1(t, w, b):
        return jnp.einsum('bchw,oc->bohw', t, w) + b[None, :, None, None]

    def pool(t):
        b_, c_, h_, w_ = t.shape
        return t.reshape(b_, c_, h_ // 2, 2, w_ // 2, 2).max(axis=(3, 5))

    g_x = pool(conv1x1(x, params["w_g"], params["b_g"]))
    g_x = g_x.reshape(B, Cint, -1).transpose(0, 2, 1)
    theta_x = conv1x1(x, params["w_theta"], params["b_theta"])
    theta_x = theta_x.reshape(B, Cint, -1).transpose(0, 2, 1)
    phi_x = pool(conv1x1(x, params["w_phi"], params["b_phi"]))
    phi_x = phi_x.reshape(B, Cint, -1)
    f = jnp.einsum('bnc,bcm->bnm', theta_x, phi_x)
    f_div_c = jax.nn.softmax(f, axis=-1)
    y = jnp.einsum('bnm,bmc->bnc', f_div_c, g_x)
    y = y.transpose(0, 2, 1).reshape(B, Cint, H, W)
    wy = conv1x1(y, params["w_W"], params["b_W"])
    inv = lax.rsqrt(params["bn_var"] + 1e-5)
    bn = ((wy - params["bn_mean"][None, :, None, None])
          * (inv * params["bn_gamma"])[None, :, None, None]
          + params["bn_beta"][None, :, None, None])
    return bn + x


if __name__ == "__main__":
    key = jax.random.PRNGKey(0)
    k_x, k_p, k_bn = jax.random.split(key, 3)

    B, C, H, W = 2, 4, 16, 16
    x = jax.random.normal(k_x, (B, C, H, W), dtype=jnp.float32)
    params = init_params(k_p, C)

    # The module inits BN weight/bias to 0 (so z == x exactly); perturb the BN
    # state so the correctness check actually exercises the attention path.
    kb = jax.random.split(k_bn, 4)
    params["bn_gamma"] = jax.random.normal(kb[0], (C,), jnp.float32)
    params["bn_beta"] = jax.random.normal(kb[1], (C,), jnp.float32)
    params["bn_mean"] = 0.1 * jax.random.normal(kb[2], (C,), jnp.float32)
    params["bn_var"] = jnp.abs(jax.random.normal(kb[3], (C,), jnp.float32)) + 0.5

    z = jax.block_until_ready(nonlocal_block(x, params))
    z_ref = nonlocal_block_reference(x, params)

    assert z.shape == (B, C, H, W)
    # bf16 matmul operands / bf16 x in HBM / approx reciprocal -> relaxed tol
    assert jnp.allclose(z, z_ref, atol=5e-2, rtol=5e-2), float(
        jnp.max(jnp.abs(z - z_ref)))

    print("KERNEL_OK")
</pallas_src>

<mosaic_0001>
module attributes {stable_mosaic.version = 11 : i64} {
  func.func @_nonlocal_kernel(%arg0: i32, %arg1: i32, %arg2: memref<1x128x8xbf16, #tpu.memory_space<vmem>>, %arg3: memref<1x8x128xbf16, #tpu.memory_space<vmem>>, %arg4: memref<1x128x8xbf16, #tpu.memory_space<vmem>>, %arg5: memref<8x8xbf16, #tpu.memory_space<vmem>>, %arg6: memref<1x8xf32, #tpu.memory_space<vmem>>, %arg7: memref<8x8xbf16, #tpu.memory_space<vmem>>, %arg8: memref<1x8xf32, #tpu.memory_space<vmem>>, %arg9: memref<1x128x8xf32, #tpu.memory_space<vmem>>) attributes {dimension_semantics = [#tpu.dimension_semantics<parallel>, #tpu.dimension_semantics<parallel>], iteration_bounds = array<i64: 2, 2>, scalar_prefetch = 0 : i64, scratch_operands = 0 : i64, tpu.core_type = #tpu.core_type<tc>, window_params = [{transform_indices = @transform_0, window_bounds = array<i64: 1, 128, 8>}, {pipeline_mode = #tpu.pipeline_mode<synchronous>, transform_indices = @transform_1, window_bounds = array<i64: 1, 8, 128>}, {pipeline_mode = #tpu.pipeline_mode<synchronous>, transform_indices = @transform_2, window_bounds = array<i64: 1, 128, 8>}, {pipeline_mode = #tpu.pipeline_mode<synchronous>, transform_indices = @transform_3, window_bounds = array<i64: 8, 8>}, {pipeline_mode = #tpu.pipeline_mode<synchronous>, transform_indices = @transform_4, window_bounds = array<i64: 1, 8>}, {pipeline_mode = #tpu.pipeline_mode<synchronous>, transform_indices = @transform_5, window_bounds = array<i64: 8, 8>}, {pipeline_mode = #tpu.pipeline_mode<synchronous>, transform_indices = @transform_6, window_bounds = array<i64: 1, 8>}, {transform_indices = @transform_7, window_bounds = array<i64: 1, 128, 8>}]} {
    %c0 = arith.constant 0 : index
    %c0_0 = arith.constant 0 : index
    %c0_1 = arith.constant 0 : index
    %0 = vector.load %arg2[%c0, %c0_0, %c0_1] : memref<1x128x8xbf16, #tpu.memory_space<vmem>>, vector<1x128x8xbf16>
    %1 = vector.shape_cast %0 : vector<1x128x8xbf16> to vector<128x8xbf16>
    %c0_2 = arith.constant 0 : index
    %c0_3 = arith.constant 0 : index
    %2 = vector.load %arg5[%c0_2, %c0_3] : memref<8x8xbf16, #tpu.memory_space<vmem>>, vector<8x8xbf16>
    %cst = arith.constant dense<0.000000e+00> : vector<128x8xf32>
    %3 = tpu.matmul %1, %2, %cst {dimension_numbers = #tpu.dot_dimension_numbers<[1], [0], [0], [1], [0, 0, 1, 1], [], []>} : vector<128x8xbf16>, vector<8x8xbf16>, vector<128x8xf32> -> vector<128x8xf32>
    %c0_4 = arith.constant 0 : index
    %c0_5 = arith.constant 0 : index
    %4 = vector.load %arg6[%c0_4, %c0_5] : memref<1x8xf32, #tpu.memory_space<vmem>>, vector<1x8xf32>
    %5 = vector.broadcast %4 : vector<1x8xf32> to vector<128x8xf32>
    %6 = arith.addf %3, %5 : vector<128x8xf32>
    %7 = arith.truncf %6 : vector<128x8xf32> to vector<128x8xbf16>
    %c0_6 = arith.constant 0 : index
    %c0_7 = arith.constant 0 : index
    %c0_8 = arith.constant 0 : index
    %8 = vector.load %arg3[%c0_6, %c0_7, %c0_8] : memref<1x8x128xbf16, #tpu.memory_space<vmem>>, vector<1x8x128xbf16>
    %9 = vector.shape_cast %8 : vector<1x8x128xbf16> to vector<8x128xbf16>
    %cst_9 = arith.constant dense<0.000000e+00> : vector<128x128xf32>
    %10 = tpu.matmul %7, %9, %cst_9 {dimension_numbers = #tpu.dot_dimension_numbers<[1], [0], [0], [1], [0, 0, 1, 1], [], []>} : vector<128x8xbf16>, vector<8x128xbf16>, vector<128x128xf32> -> vector<128x128xf32>
    %11 = tpu.iota {dimensions = array<i32: 1>} : vector<1x128xi32>
    %c64_i32 = arith.constant 64 : i32
    %12 = vector.broadcast %c64_i32 : i32 to vector<1x128xi32>
    %13 = arith.cmpi slt, %11, %12 : vector<1x128xi32>
    %cst_10 = arith.constant -1.000000e+30 : f32
    %14 = vector.shape_cast %13 : vector<1x128xi1> to vector<1x128xi1>
    %15 = vector.broadcast %14 : vector<1x128xi1> to vector<128x128xi1>
    %16 = vector.broadcast %cst_10 : f32 to vector<128x128xf32>
    %17 = arith.select %15, %10, %16 : vector<128x128xi1>, vector<128x128xf32>
    %cst_11 = arith.constant dense<0xFF800000> : vector<128xf32>
    %18 = vector.multi_reduction <maximumf>, %17, %cst_11 [1] : vector<128x128xf32> to vector<128xf32>
    %19 = vector.shape_cast %18 : vector<128xf32> to vector<128x1xf32>
    %20 = vector.broadcast %19 : vector<128x1xf32> to vector<128x128xf32>
    %21 = arith.subf %17, %20 : vector<128x128xf32>
    %22 = arith.truncf %21 : vector<128x128xf32> to vector<128x128xbf16>
    %23 = math.exp %22 : vector<128x128xbf16>
    %24 = arith.extf %23 : vector<128x128xbf16> to vector<128x128xf32>
    %cst_12 = arith.constant dense<0.000000e+00> : vector<128xf32>
    %25 = vector.multi_reduction <add>, %24, %cst_12 [1] : vector<128x128xf32> to vector<128xf32>
    %26 = vector.shape_cast %25 : vector<128xf32> to vector<128x1xf32>
    %c0_13 = arith.constant 0 : index
    %c0_14 = arith.constant 0 : index
    %c0_15 = arith.constant 0 : index
    %27 = vector.load %arg4[%c0_13, %c0_14, %c0_15] : memref<1x128x8xbf16, #tpu.memory_space<vmem>>, vector<1x128x8xbf16>
    %28 = vector.shape_cast %27 : vector<1x128x8xbf16> to vector<128x8xbf16>
    %cst_16 = arith.constant dense<0.000000e+00> : vector<128x8xf32>
    %29 = tpu.matmul %23, %28, %cst_16 {dimension_numbers = #tpu.dot_dimension_numbers<[1], [0], [0], [1], [0, 0, 1, 1], [], []>} : vector<128x128xbf16>, vector<128x8xbf16>, vector<128x8xf32> -> vector<128x8xf32>
    %30 = tpu.reciprocal %26 {approx = true} : vector<128x1xf32> -> vector<128x1xf32>
    %31 = vector.broadcast %30 : vector<128x1xf32> to vector<128x8xf32>
    %32 = arith.mulf %29, %31 : vector<128x8xf32>
    %33 = arith.truncf %32 : vector<128x8xf32> to vector<128x8xbf16>
    %c0_17 = arith.constant 0 : index
    %c0_18 = arith.constant 0 : index
    %34 = vector.load %arg7[%c0_17, %c0_18] : memref<8x8xbf16, #tpu.memory_space<vmem>>, vector<8x8xbf16>
    %cst_19 = arith.constant dense<0.000000e+00> : vector<128x8xf32>
    %35 = tpu.matmul %33, %34, %cst_19 {dimension_numbers = #tpu.dot_dimension_numbers<[1], [0], [0], [1], [0, 0, 1, 1], [], []>} : vector<128x8xbf16>, vector<8x8xbf16>, vector<128x8xf32> -> vector<128x8xf32>
    %c0_20 = arith.constant 0 : index
    %c0_21 = arith.constant 0 : index
    %36 = vector.load %arg8[%c0_20, %c0_21] : memref<1x8xf32, #tpu.memory_space<vmem>>, vector<1x8xf32>
    %37 = vector.broadcast %36 : vector<1x8xf32> to vector<128x8xf32>
    %38 = arith.addf %35, %37 : vector<128x8xf32>
    %39 = arith.extf %1 : vector<128x8xbf16> to vector<128x8xf32>
    %40 = arith.addf %38, %39 : vector<128x8xf32>
    %c0_22 = arith.constant 0 : index
    %c0_23 = arith.constant 0 : index
    %c0_24 = arith.constant 0 : index
    %41 = vector.load %arg9[%c0_22, %c0_23, %c0_24] : memref<1x128x8xf32, #tpu.memory_space<vmem>>, vector<1x128x8xf32>
    %42 = vector.shape_cast %41 : vector<1x128x8xf32> to vector<128x8xf32>
    %43 = vector.shape_cast %40 : vector<128x8xf32> to vector<1x128x8xf32>
    tpu.vector_store %arg9[%c0_22, %c0_23, %c0_24], %43 {strides = array<i32>} : memref<1x128x8xf32, #tpu.memory_space<vmem>>, vector<1x128x8xf32>,
    return
  }
  func.func @transform_0(%arg0: i32, %arg1: i32) -> (i32, i32, i32) {
    %c0_i32 = arith.constant 0 : i32
    %c0_i32_0 = arith.constant 0 : i32
    return %arg0, %arg1, %c0_i32 : i32, i32, i32
  }
  func.func @transform_1(%arg0: i32, %arg1: i32) -> (i32, i32, i32) {
    %c0_i32 = arith.constant 0 : i32
    %c0_i32_0 = arith.constant 0 : i32
    %c0_i32_1 = arith.constant 0 : i32
    return %arg0, %c0_i32, %c0_i32_0 : i32, i32, i32
  }
  func.func @transform_2(%arg0: i32, %arg1: i32) -> (i32, i32, i32) {
    %c0_i32 = arith.constant 0 : i32
    %c0_i32_0 = arith.constant 0 : i32
    %c0_i32_1 = arith.constant 0 : i32
    return %arg0, %c0_i32, %c0_i32_0 : i32, i32, i32
  }
  func.func @transform_3(%arg0: i32, %arg1: i32) -> (i32, i32) {
    %c0_i32 = arith.constant 0 : i32
    %c0_i32_0 = arith.constant 0 : i32
    %c0_i32_1 = arith.constant 0 : i32
    return %c0_i32, %c0_i32_0 : i32, i32
  }
  func.func @transform_4(%arg0: i32, %arg1: i32) -> (i32, i32) {
    %c0_i32 = arith.constant 0 : i32
    %c0_i32_0 = arith.constant 0 : i32
    %c0_i32_1 = arith.constant 0 : i32
    return %c0_i32, %c0_i32_0 : i32, i32
  }
  func.func @transform_5(%arg0: i32, %arg1: i32) -> (i32, i32) {
    %c0_i32 = arith.constant 0 : i32
    %c0_i32_0 = arith.constant 0 : i32
    %c0_i32_1 = arith.constant 0 : i32
    return %c0_i32, %c0_i32_0 : i32, i32
  }
  func.func @transform_6(%arg0: i32, %arg1: i32) -> (i32, i32) {
    %c0_i32 = arith.constant 0 : i32
    %c0_i32_0 = arith.constant 0 : i32
    %c0_i32_1 = arith.constant 0 : i32
    return %c0_i32, %c0_i32_0 : i32, i32
  }
  func.func @transform_7(%arg0: i32, %arg1: i32) -> (i32, i32, i32) {
    %c0_i32 = arith.constant 0 : i32
    %c0_i32_0 = arith.constant 0 : i32
    return %arg0, %arg1, %c0_i32 : i32, i32, i32
  }
}

</mosaic_0001>

<llo_original>
// kernel: nonlocal_block.1
$region0: #{nonlocal_block.1}
  #allocation0 [shape = 'u32[]', space=smem, size = 0x4, offset = 0x4, fixed_abs, tag = 'smem constant byte address 0x4 - core index']
  #allocation1 [shape = 'u32[144,128]{1,0:T(1,128)}', space=vmem, size = 0x12000, scoped, tag = 'internal scratch']
  %s0 = inlined_call_operand.vmem [shape: bf16[2,256,8], index: 0, kind: input, shape index: {}]
  %s1 = inlined_call_operand.vmem [shape: bf16[2,8,128], index: 1, kind: input, shape index: {}]
  %s2 = inlined_call_operand.vmem [shape: bf16[2,128,8], index: 2, kind: input, shape index: {}]
  %s3 = inlined_call_operand.vmem [shape: bf16[8,8], index: 3, kind: input, shape index: {}]
  %s4 = inlined_call_operand.vmem [shape: f32[1,8], index: 4, kind: input, shape index: {}]
  %s5 = inlined_call_operand.vmem [shape: bf16[8,8], index: 5, kind: input, shape index: {}]
  %s6 = inlined_call_operand.vmem [shape: f32[1,8], index: 6, kind: input, shape index: {}]
  %s7 = inlined_call_operand.vmem [shape: f32[2,256,8], index: 7, kind: output, shape index: {}]
  %s8 = sld [smem:[#allocation0]]
  $region61: #{nonlocal_block.1} parent=0
    _
  %s10 = ssub.s32 1, %s8
  %s11 = scalar_select 0, %s10, %s8
  loop: start=0, step=1, limit=6
  $region2: #{nonlocal_block.1} parent=0 // loop_pre_header
    _
  $region3: #{nonlocal_block.1} parent=0 // loop_header
    %s13 = sphi 0, %s17
    %p14 = scmp.ge.s32.totalorder %s13, 6
    %s20 = sphi 0, %s32
    %s21 = sphi 0, %s28
    %s22 = sphi 0, %s20
    %s23 = sphi 0, %s21
    %s24 = sphi 0, %s22
    %s25 = sphi 0, %s23
    %s37 = sphi 0, %s39
    %s40 = sphi 0, %s37
    %s41 = sphi 0, %s40
    %s57 = sphi 0, %s41
    %s63 = sphi 0, %s65
    %s66 = sphi 0, %s63
    %s67 = sphi 0, %s66
    %s83 = sphi 0, %s67
    %s89 = sphi 0, %s91
    %s92 = sphi 0, %s89
    %s93 = sphi 0, %s92
    %s109 = sphi 0, %s93
    %s113 = sphi 0, %s113
    %s115 = sphi 0, %s113
    %s116 = sphi 0, %s115
    %s130 = sphi 0, %s116
    %s134 = sphi 0, %s134
    %s136 = sphi 0, %s134
    %s137 = sphi 0, %s136
    %s151 = sphi 0, %s137
    %s155 = sphi 0, %s155
    %s157 = sphi 0, %s155
    %s158 = sphi 0, %s157
    %s172 = sphi 0, %s158
    %s176 = sphi 0, %s176
    %s178 = sphi 0, %s176
    %s179 = sphi 0, %s178
    %s193 = sphi 0, %s179
    %s201 = sphi 0, %s203
    %s204 = sphi 0, %s201
    %s205 = sphi 0, %s204
    %s221 = sphi 0, %s205
  $region4: #{nonlocal_block.1} parent=0 // loop_header_branch
    %16 = sbr.rel (%p14) target = $region8
  $region5: #{nonlocal_block.1} parent=0 // loop_body
    %s18 = ssub.s32 %s13, 1
    %s19 = ssub.s32 %s13, 2
    %s26 = sadd.s32 1, %s21
    %p27 = scmp.ge.s32.totalorder %s26, 2
    %s28 = scalar_select %p27, 0, %s26
    %s29 = sadd.s32 1, %s20
    %s30 = scalar_select %p27, %s29, %s20
    %p31 = scmp.ge.s32.totalorder %s30, 2
    %s32 = scalar_select %p31, 0, %s30
    %s33 = ssub.s32 %s20, %s32
    %s34 = ssub.s32 %s21, %s28
    %s35 = sor.u32 %s33, %s34
    %p36 = scmp.eq.s32.totalorder %s35, 0
    %s38 = sadd.s32 %s37, 1
    %s39 = scalar_select %p36, %s37, %s38
    %p42 = pneg %p36
    %p43 = scmp.eq.s32.totalorder %s13, 3
    %p44 = por %p42, %p43
    %p45 = scmp.ne.s32.totalorder %s37, %s40
    %p46 = scmp.eq.s32.totalorder %s13, 0
    %p47 = por %p45, %p46
    %p48 = scmp.ne.s32.totalorder %s37, %s40
    %p49 = scmp.eq.s32.totalorder %s18, 3
    %p50 = por %p48, %p49
    %p51 = scmp.ne.s32.totalorder %s40, %s41
    %p52 = scmp.eq.s32.totalorder %s18, 0
    %p53 = por %p51, %p52
    %p54 = scmp.ne.s32.totalorder %s40, %s41
    %p55 = scmp.eq.s32.totalorder %s19, 3
    %p56 = por %p54, %p55
    %p58 = scmp.ne.s32.totalorder %s41, %s57
    %p59 = scmp.eq.s32.totalorder %s19, 0
    %p60 = por %p58, %p59
    %s61 = ssub.s32 %s20, %s32
    %p62 = scmp.eq.s32.totalorder %s61, 0
    %s64 = sadd.s32 %s63, 1
    %s65 = scalar_select %p62, %s63, %s64
    %p68 = pneg %p62
    %p69 = scmp.eq.s32.totalorder %s13, 3
    %p70 = por %p68, %p69
    %p71 = scmp.ne.s32.totalorder %s63, %s66
    %p72 = scmp.eq.s32.totalorder %s13, 0
    %p73 = por %p71, %p72
    %p74 = scmp.ne.s32.totalorder %s63, %s66
    %p75 = scmp.eq.s32.totalorder %s18, 3
    %p76 = por %p74, %p75
    %p77 = scmp.ne.s32.totalorder %s66, %s67
    %p78 = scmp.eq.s32.totalorder %s18, 0
    %p79 = por %p77, %p78
    %p80 = scmp.ne.s32.totalorder %s66, %s67
    %p81 = scmp.eq.s32.totalorder %s19, 3
    %p82 = por %p80, %p81
    %p84 = scmp.ne.s32.totalorder %s67, %s83
    %p85 = scmp.eq.s32.totalorder %s19, 0
    %p86 = por %p84, %p85
    %s87 = ssub.s32 %s20, %s32
    %p88 = scmp.eq.s32.totalorder %s87, 0
    %s90 = sadd.s32 %s89, 1
    %s91 = scalar_select %p88, %s89, %s90
    %p94 = pneg %p88
    %p95 = scmp.eq.s32.totalorder %s13, 3
    %p96 = por %p94, %p95
    %p97 = scmp.ne.s32.totalorder %s89, %s92
    %p98 = scmp.eq.s32.totalorder %s13, 0
    %p99 = por %p97, %p98
    %p100 = scmp.ne.s32.totalorder %s89, %s92
    %p101 = scmp.eq.s32.totalorder %s18, 3
    %p102 = por %p100, %p101
    %p103 = scmp.ne.s32.totalorder %s92, %s93
    %p104 = scmp.eq.s32.totalorder %s18, 0
    %p105 = por %p103, %p104
    %p106 = scmp.ne.s32.totalorder %s92, %s93
    %p107 = scmp.eq.s32.totalorder %s19, 3
    %p108 = por %p106, %p107
    %p110 = scmp.ne.s32.totalorder %s93, %s109
    %p111 = scmp.eq.s32.totalorder %s19, 0
    %p112 = por %p110, %p111
    %s114 = sadd.s32 %s113, 1
    %p117 = scmp.eq.s32.totalorder %s13, 3
    %p118 = scmp.ne.s32.totalorder %s113, %s115
    %p119 = scmp.eq.s32.totalorder %s13, 0
    %p120 = por %p118, %p119
    %p121 = scmp.ne.s32.totalorder %s113, %s115
    %p122 = scmp.eq.s32.totalorder %s18, 3
    %p123 = por %p121, %p122
    %p124 = scmp.ne.s32.totalorder %s115, %s116
    %p125 = scmp.eq.s32.totalorder %s18, 0
    %p126 = por %p124, %p125
    %p127 = scmp.ne.s32.totalorder %s115, %s116
    %p128 = scmp.eq.s32.totalorder %s19, 3
    %p129 = por %p127, %p128
    %p131 = scmp.ne.s32.totalorder %s116, %s130
    %p132 = scmp.eq.s32.totalorder %s19, 0
    %p133 = por %p131, %p132
    %s135 = sadd.s32 %s134, 1
    %p138 = scmp.eq.s32.totalorder %s13, 3
    %p139 = scmp.ne.s32.totalorder %s134, %s136
    %p140 = scmp.eq.s32.totalorder %s13, 0
    %p141 = por %p139, %p140
    %p142 = scmp.ne.s32.totalorder %s134, %s136
    %p143 = scmp.eq.s32.totalorder %s18, 3
    %p144 = por %p142, %p143
    %p145 = scmp.ne.s32.totalorder %s136, %s137
    %p146 = scmp.eq.s32.totalorder %s18, 0
    %p147 = por %p145, %p146
    %p148 = scmp.ne.s32.totalorder %s136, %s137
    %p149 = scmp.eq.s32.totalorder %s19, 3
    %p150 = por %p148, %p149
    %p152 = scmp.ne.s32.totalorder %s137, %s151
    %p153 = scmp.eq.s32.totalorder %s19, 0
    %p154 = por %p152, %p153
    %s156 = sadd.s32 %s155, 1
    %p159 = scmp.eq.s32.totalorder %s13, 3
    %p160 = scmp.ne.s32.totalorder %s155, %s157
    %p161 = scmp.eq.s32.totalorder %s13, 0
    %p162 = por %p160, %p161
    %p163 = scmp.ne.s32.totalorder %s155, %s157
    %p164 = scmp.eq.s32.totalorder %s18, 3
    %p165 = por %p163, %p164
    %p166 = scmp.ne.s32.totalorder %s157, %s158
    %p167 = scmp.eq.s32.totalorder %s18, 0
    %p168 = por %p166, %p167
    %p169 = scmp.ne.s32.totalorder %s157, %s158
    %p170 = scmp.eq.s32.totalorder %s19, 3
    %p171 = por %p169, %p170
    %p173 = scmp.ne.s32.totalorder %s158, %s172
    %p174 = scmp.eq.s32.totalorder %s19, 0
    %p175 = por %p173, %p174
    %s177 = sadd.s32 %s176, 1
    %p180 = scmp.eq.s32.totalorder %s13, 3
    %p181 = scmp.ne.s32.totalorder %s176, %s178
    %p182 = scmp.eq.s32.totalorder %s13, 0
    %p183 = por %p181, %p182
    %p184 = scmp.ne.s32.totalorder %s176, %s178
    %p185 = scmp.eq.s32.totalorder %s18, 3
    %p186 = por %p184, %p185
    %p187 = scmp.ne.s32.totalorder %s178, %s179
    %p188 = scmp.eq.s32.totalorder %s18, 0
    %p189 = por %p187, %p188
    %p190 = scmp.ne.s32.totalorder %s178, %s179
    %p191 = scmp.eq.s32.totalorder %s19, 3
    %p192 = por %p190, %p191
    %p194 = scmp.ne.s32.totalorder %s179, %s193
    %p195 = scmp.eq.s32.totalorder %s19, 0
    %p196 = por %p194, %p195
    %s197 = ssub.s32 %s20, %s32
    %s198 = ssub.s32 %s21, %s28
    %s199 = sor.u32 %s197, %s198
    %p200 = scmp.eq.s32.totalorder %s199, 0
    %s202 = sadd.s32 %s201, 1
    %s203 = scalar_select %p200, %s201, %s202
    %p206 = pneg %p200
    %p207 = scmp.eq.s32.totalorder %s13, 3
    %p208 = por %p206, %p207
    %p209 = scmp.ne.s32.totalorder %s201, %s204
    %p210 = scmp.eq.s32.totalorder %s13, 0
    %p211 = por %p209, %p210
    %p212 = scmp.ne.s32.totalorder %s201, %s204
    %p213 = scmp.eq.s32.totalorder %s18, 3
    %p214 = por %p212, %p213
    %p215 = scmp.ne.s32.totalorder %s204, %s205
    %p216 = scmp.eq.s32.totalorder %s18, 0
    %p217 = por %p215, %p216
    %p218 = scmp.ne.s32.totalorder %s204, %s205
    %p219 = scmp.eq.s32.totalorder %s19, 3
    %p220 = por %p218, %p219
    %p222 = scmp.ne.s32.totalorder %s205, %s221
    %p223 = scmp.eq.s32.totalorder %s19, 0
    %p224 = por %p222, %p223
    %p225 = scmp.le.s32.totalorder 1, %s13
    %p226 = scmp.lt.s32.totalorder %s13, 5
    %p227 = pnand %p225, %p226
    %p228 = pneg %p227
    // Predicated region
    $region9: #{nonlocal_block.1} parent=5 // pred_check
      _
    $region10: #{nonlocal_block.1} parent=5 // pred_check_branch
      %230 = sbr.rel (%p227) target = $region12
    $region11: #{nonlocal_block.1} parent=5 // pred_region
      %s231 = ssub.s32 %s13, 1
      // Predicated region
      $region13: #{nonlocal_block.1} parent=11 // pred_check
        %p232 = pneg %p79
      $region14: #{nonlocal_block.1} parent=11 // pred_check_branch
        %234 = sbr.rel (%p232) target = $region16
      $region15: #{nonlocal_block.1} parent=11 // pred_region
        %p235 = scmp.lt.s32.totalorder %s22, 1
        %s236 = scalar_select %p235, %s22, 1
        %s237 = smul.addr %s236, 4
        %s238 = scalar_lea.vmem %s1, %s237
      $region16: #{nonlocal_block.1} parent=11 // pred_fallthru
        _
      // Predicated region
      $region17: #{nonlocal_block.1} parent=11 // pred_check
        %p239 = pneg %p105
      $region18: #{nonlocal_block.1} parent=11 // pred_check_branch
        %241 = sbr.rel (%p239) target = $region20
      $region19: #{nonlocal_block.1} parent=11 // pred_region
        %p242 = scmp.lt.s32.totalorder %s22, 1
        %s243 = scalar_select %p242, %s22, 1
        %s244 = smul.addr %s243, 16
        %s245 = smul.addr %s244, 4
        %s246 = scalar_lea.vmem %s2, %s245
      $region20: #{nonlocal_block.1} parent=11 // pred_fallthru
        _
      // Predicated region
      $region21: #{nonlocal_block.1} parent=11 // pred_check
        %p247 = pneg %p126
      $region22: #{nonlocal_block.1} parent=11 // pred_check_branch
        %249 = sbr.rel (%p247) target = $region24
      $region23: #{nonlocal_block.1} parent=11 // pred_region
        _
      $region24: #{nonlocal_block.1} parent=11 // pred_fallthru
        _
      // Predicated region
      $region25: #{nonlocal_block.1} parent=11 // pred_check
        %p250 = pneg %p147
      $region26: #{nonlocal_block.1} parent=11 // pred_check_branch
        %252 = sbr.rel (%p250) target = $region28
      $region27: #{nonlocal_block.1} parent=11 // pred_region
        _
      $region28: #{nonlocal_block.1} parent=11 // pred_fallthru
        _
      // Predicated region
      $region29: #{nonlocal_block.1} parent=11 // pred_check
        %p253 = pneg %p168
      $region30: #{nonlocal_block.1} parent=11 // pred_check_branch
        %255 = sbr.rel (%p253) target = $region32
      $region31: #{nonlocal_block.1} parent=11 // pred_region
        _
      $region32: #{nonlocal_block.1} parent=11 // pred_fallthru
        _
      // Predicated region
      $region33: #{nonlocal_block.1} parent=11 // pred_check
        %p256 = pneg %p189
      $region34: #{nonlocal_block.1} parent=11 // pred_check_branch
        %258 = sbr.rel (%p256) target = $region36
      $region35: #{nonlocal_block.1} parent=11 // pred_region
        _
      $region36: #{nonlocal_block.1} parent=11 // pred_fallthru
        _
    $region12: #{nonlocal_block.1} parent=5 // pred_fallthru
      _
    %p259 = scmp.lt.s32.totalorder %s13, 4
    // Predicated region
    $region37: #{nonlocal_block.1} parent=5 // pred_check
      %p260 = pneg %p259
    $region38: #{nonlocal_block.1} parent=5 // pred_check_branch
      %262 = sbr.rel (%p260) target = $region40
    $region39: #{nonlocal_block.1} parent=5 // pred_region
      // Predicated region
      $region41: #{nonlocal_block.1} parent=39 // pred_check
        %p263 = pneg %p47
      $region42: #{nonlocal_block.1} parent=39 // pred_check_branch
        %265 = sbr.rel (%p263) target = $region44
      $region43: #{nonlocal_block.1} parent=39 // pred_region
        %s266 = smul.u32 16, %s21
        %p267 = scmp.lt.s32.totalorder %s20, 1
        %s268 = scalar_select %p267, %s20, 1
        %p269 = scmp.lt.s32.totalorder %s266, 31
        %s270 = scalar_select %p269, %s266, 31
        %s271 = smul.addr %s268, 32
        %s272 = sadd.s32 %s270, %s271
        %s273 = smul.addr %s272, 4
        %s274 = scalar_lea.vmem %s0, %s273
        %s275 = smul.u32 16, %s21
      $region44: #{nonlocal_block.1} parent=39 // pred_fallthru
        _
    $region40: #{nonlocal_block.1} parent=5 // pred_fallthru
      _
    %p276 = scmp.le.s32.totalorder 1, %s13
    %p277 = scmp.lt.s32.totalorder %s13, 5
    %p278 = pnand %p276, %p277
    %p279 = pneg %p278
    // Predicated region
    $region45: #{nonlocal_block.1} parent=5 // pred_check
      _
    $region46: #{nonlocal_block.1} parent=5 // pred_check_branch
      %281 = sbr.rel (%p278) target = $region48
    $region47: #{nonlocal_block.1} parent=5 // pred_region
      %s282 = ssub.s32 %s13, 1
      %s283 = smul.u32 16, %s23
      %p284 = scmp.lt.s32.totalorder %s22, 1
      %s285 = scalar_select %p284, %s22, 1
      %p286 = scmp.lt.s32.totalorder %s283, 31
      %s287 = scalar_select %p286, %s283, 31
      %s288 = smul.addr %s285, 32
      %s289 = sadd.s32 %s287, %s288
      %s290 = smul.addr %s289, 4
      %s291 = scalar_lea.vmem %s0, %s290
      %p292 = pneg %p53
      %p293 = pneg %p50
      %p294 = scmp.lt.s32.totalorder %s22, 1
      %s295 = scalar_select %p294, %s22, 1
      %s296 = smul.addr %s295, 4
      %s297 = scalar_lea.vmem %s1, %s296
      %p298 = pneg %p79
      %p299 = pneg %p76
      %p300 = scmp.lt.s32.totalorder %s22, 1
      %s301 = scalar_select %p300, %s22, 1
      %s302 = smul.addr %s301, 16
      %s303 = smul.addr %s302, 4
      %s304 = scalar_lea.vmem %s2, %s303
      %p305 = pneg %p105
      %p306 = pneg %p102
      %p307 = pneg %p126
      %p308 = pneg %p123
      %p309 = pneg %p147
      %p310 = pneg %p144
      %p311 = pneg %p168
      %p312 = pneg %p165
      %p313 = pneg %p189
      %p314 = pneg %p186
      %p315 = pneg %p217
      %p316 = pneg %p214
      %s317 = smul.u32 16, %s23
      %p318 = scmp.lt.s32.totalorder %s22, 1
      %s319 = scalar_select %p318, %s22, 1
      %p320 = scmp.lt.s32.totalorder %s317, 31
      %s321 = scalar_select %p320, %s317, 31
      %s322 = smul.addr %s319, 32
      %s323 = sadd.s32 %s321, %s322
      %s324 = smul.addr %s323, 8
      %s325 = scalar_lea.vmem %s7, %s324
      %s326 = smul.u32 16, %s23
      %p327 = scmp.lt.s32.totalorder %s22, 1
      %s328 = scalar_select %p327, %s22, 1
      %p329 = scmp.lt.s32.totalorder %s326, 31
      %s330 = scalar_select %p329, %s326, 31
      %s331 = smul.addr %s328, 32
      %s332 = sadd.s32 %s330, %s331
      %s333 = smul.addr %s332, 4
      %s334 = scalar_lea.vmem %s0, %s333
      %s335 = smul.u32 16, %s23
      %p336 = scmp.lt.s32.totalorder %s22, 1
      %s337 = scalar_select %p336, %s22, 1
      %s338 = smul.addr %s337, 4
      %s339 = scalar_lea.vmem %s1, %s338
      %p340 = scmp.lt.s32.totalorder %s22, 1
      %s341 = scalar_select %p340, %s22, 1
      %s342 = smul.addr %s341, 16
      %s343 = smul.addr %s342, 4
      %s344 = scalar_lea.vmem %s2, %s343
      %s345 = smul.u32 16, %s23
      %p346 = scmp.lt.s32.totalorder %s22, 1
      %s347 = scalar_select %p346, %s22, 1
      %p348 = scmp.lt.s32.totalorder %s345, 31
      %s349 = scalar_select %p348, %s345, 31
      %s350 = smul.addr %s347, 32
      %s351 = sadd.s32 %s349, %s350
      %s352 = smul.addr %s351, 8
      %s353 = scalar_lea.vmem %s7, %s352
      %s354 = smul.u32 16, %s23
      %v356 = vld [vmem:[%s334] sm:$0xf]
      %v357 = vld [vmem:[%s334 + $0x4] sm:$0xf]
      %v358 = vld [vmem:[%s334 + $0x8] sm:$0xf]
      %v359 = vld [vmem:[%s334 + $0xc] sm:$0xf]
      %v360 = vld [vmem:[%s334 + $0x10] sm:$0xf]
      %v361 = vld [vmem:[%s334 + $0x14] sm:$0xf]
      %v362 = vld [vmem:[%s334 + $0x18] sm:$0xf]
      %v363 = vld [vmem:[%s334 + $0x1c] sm:$0xf]
      %v364 = vld [vmem:[%s334 + $0x20] sm:$0xf]
      %v365 = vld [vmem:[%s334 + $0x24] sm:$0xf]
      %v366 = vld [vmem:[%s334 + $0x28] sm:$0xf]
      %v367 = vld [vmem:[%s334 + $0x2c] sm:$0xf]
      %v368 = vld [vmem:[%s334 + $0x30] sm:$0xf]
      %v369 = vld [vmem:[%s334 + $0x34] sm:$0xf]
      %v370 = vld [vmem:[%s334 + $0x38] sm:$0xf]
      %v371 = vld [vmem:[%s334 + $0x3c] sm:$0xf]
      %v372 = vld [vmem:[%s3] sm:$0xf]
      %v373 = vld [vmem:[%s4] sm:$0x1]
      %v375 = vlaneseq
      %v376 = vshrl.u32 %v375, 7
      %v377 = vsub.s32 0, %v376
      %v378 = vrot.slane %v373, %v377
      %v396 = vunpack.c.l.b16 %v356
      %v397 = vunpack.c.l.b16 %v357
      %v398 = vunpack.c.l.b16 %v358
      %v399 = vunpack.c.l.b16 %v359
      %v400 = vunpack.c.l.b16 %v360
      %v401 = vunpack.c.l.b16 %v361
      %v402 = vunpack.c.l.b16 %v362
      %v403 = vunpack.c.l.b16 %v363
      %v404 = vunpack.c.l.b16 %v364
      %v405 = vunpack.c.l.b16 %v365
      %v406 = vunpack.c.l.b16 %v366
      %v407 = vunpack.c.l.b16 %v367
      %v408 = vunpack.c.l.b16 %v368
      %v409 = vunpack.c.l.b16 %v369
      %v410 = vunpack.c.l.b16 %v370
      %v411 = vunpack.c.l.b16 %v371
      %v412 = vpack.c.b16 %v397, %v396
      %v413 = vpack.c.b16 %v399, %v398
      %v414 = vpack.c.b16 %v401, %v400
      %v415 = vpack.c.b16 %v403, %v402
      %v416 = vpack.c.b16 %v405, %v404
      %v417 = vpack.c.b16 %v407, %v406
      %v418 = vpack.c.b16 %v409, %v408
      %v419 = vpack.c.b16 %v411, %v410
      %vm420 = vcmask 64512
      %v422 = vsel %vm420, %v412, 0
      %v425 = vsel %vm420, %v413, 0
      %v428 = vsel %vm420, %v414, 0
      %v431 = vsel %vm420, %v415, 0
      %v434 = vsel %vm420, %v416, 0
      %v437 = vsel %vm420, %v417, 0
      %v440 = vsel %vm420, %v418, 0
      %v443 = vsel %vm420, %v419, 0
      %vm445 = vcmask 1043456
      %v447 = vsel %vm445, %v372, 0
      %449 = vmatprep.subr.bf16.mxu0 0
      %450 = vmatpush1.bf16.msra.mxu0 %v447
      %451 = vmatprep.subr.bf16.mxu0 0
      %452 = vmatpush1.bf16.msra.mxu0 0
      %453 = vmatprep.subr.bf16.mxu0 0
      %454 = vmatpush1.bf16.msra.mxu0 0
      %455 = vmatprep.subr.bf16.mxu0 0
      %456 = vmatpush1.bf16.msra.mxu0 0
      %457 = vmatprep.subr.bf16.mxu0 0
      %458 = vmatpush1.bf16.msra.mxu0 0
      %459 = vmatprep.subr.bf16.mxu0 0
      %460 = vmatpush1.bf16.msra.mxu0 0
      %461 = vmatprep.subr.bf16.mxu0 0
      %462 = vmatpush1.bf16.msra.mxu0 0
      %463 = vmatprep.subr.bf16.mxu0 0
      %464 = vmatpush1.bf16.msra.mxu0 0
      %465 = vmatprep.subr.bf16.mxu0 0
      %466 = vmatpush1.bf16.msra.mxu0 0
      %467 = vmatprep.subr.bf16.mxu0 0
      %468 = vmatpush1.bf16.msra.mxu0 0
      %469 = vmatprep.subr.bf16.mxu0 0
      %470 = vmatpush1.bf16.msra.mxu0 0
      %471 = vmatprep.subr.bf16.mxu0 0
      %472 = vmatpush1.bf16.msra.mxu0 0
      %473 = vmatprep.subr.bf16.mxu0 0
      %474 = vmatpush1.bf16.msra.mxu0 0
      %475 = vmatprep.subr.bf16.mxu0 0
      %476 = vmatpush1.bf16.msra.mxu0 0
      %477 = vmatprep.subr.bf16.mxu0 0
      %478 = vmatpush1.bf16.msra.mxu0 0
      %479 = vmatprep.subr.bf16.mxu0 0
      %480 = vmatpush1.bf16.msra.mxu0 0
      %481 = vmatprep.mubr.bf16.mxu0 0
      %482 = vmatmul.mubr.bf16.gmra.mrb[0].mxu0 %v422
      %v483 = vpop.f32.mrb[0].mxu0
      %v484 = vadd.f32 %v378, %v483
      %v485 = vpop.f32.mrb[0].mxu0
      %v486 = vpop.f32.mrb[0].mxu0
      %v487 = vadd.f32 %v378, %v486
      %v488 = vpop.f32.mrb[0].mxu0
      %489 = vmatprep.mubr.bf16.mxu0 0
      %490 = vmatmul.mubr.bf16.gmra.mrb[0].mxu0 %v425
      %v491 = vpop.f32.mrb[0].mxu0
      %v492 = vadd.f32 %v378, %v491
      %v493 = vpop.f32.mrb[0].mxu0
      %v494 = vpop.f32.mrb[0].mxu0
      %v495 = vadd.f32 %v378, %v494
      %v496 = vpop.f32.mrb[0].mxu0
      %497 = vmatprep.mubr.bf16.mxu0 0
      %498 = vmatmul.mubr.bf16.gmra.mrb[0].mxu0 %v428
      %v499 = vpop.f32.mrb[0].mxu0
      %v500 = vadd.f32 %v378, %v499
      %v501 = vpop.f32.mrb[0].mxu0
      %v502 = vpop.f32.mrb[0].mxu0
      %v503 = vadd.f32 %v378, %v502
      %v504 = vpop.f32.mrb[0].mxu0
      %505 = vmatprep.mubr.bf16.mxu0 0
      %506 = vmatmul.mubr.bf16.gmra.mrb[0].mxu0 %v431
      %v507 = vpop.f32.mrb[0].mxu0
      %v508 = vadd.f32 %v378, %v507
      %v509 = vpop.f32.mrb[0].mxu0
      %v510 = vpop.f32.mrb[0].mxu0
      %v511 = vadd.f32 %v378, %v510
      %v512 = vpop.f32.mrb[0].mxu0
      %513 = vmatprep.mubr.bf16.mxu0 0
      %514 = vmatmul.mubr.bf16.gmra.mrb[0].mxu0 %v434
      %v515 = vpop.f32.mrb[0].mxu0
      %v516 = vadd.f32 %v378, %v515
      %v517 = vpop.f32.mrb[0].mxu0
      %v518 = vpop.f32.mrb[0].mxu0
      %v519 = vadd.f32 %v378, %v518
      %v520 = vpop.f32.mrb[0].mxu0
      %521 = vmatprep.mubr.bf16.mxu0 0
      %522 = vmatmul.mubr.bf16.gmra.mrb[0].mxu0 %v437
      %v523 = vpop.f32.mrb[0].mxu0
      %v524 = vadd.f32 %v378, %v523
      %v525 = vpop.f32.mrb[0].mxu0
      %v526 = vpop.f32.mrb[0].mxu0
      %v527 = vadd.f32 %v378, %v526
      %v528 = vpop.f32.mrb[0].mxu0
      %529 = vmatprep.mubr.bf16.mxu0 0
      %530 = vmatmul.mubr.bf16.gmra.mrb[0].mxu0 %v440
      %v531 = vpop.f32.mrb[0].mxu0
      %v532 = vadd.f32 %v378, %v531
      %v533 = vpop.f32.mrb[0].mxu0
      %v534 = vpop.f32.mrb[0].mxu0
      %v535 = vadd.f32 %v378, %v534
      %v536 = vpop.f32.mrb[0].mxu0
      %537 = vmatprep.mubr.bf16.mxu0 0
      %538 = vmatmul.mubr.bf16.gmra.mrb[0].mxu0 %v443
      %v539 = vpop.f32.mrb[0].mxu0
      %v540 = vadd.f32 %v378, %v539
      %v541 = vpop.f32.mrb[0].mxu0
      %v542 = vpop.f32.mrb[0].mxu0
      %v543 = vadd.f32 %v378, %v542
      %v544 = vpop.f32.mrb[0].mxu0
      %545 = vdwg.mxu0
      %v546 = vpack.c.bf16 %v487, %v484
      %v547 = vpack.c.bf16 %v495, %v492
      %v548 = vpack.c.bf16 %v503, %v500
      %v549 = vpack.c.bf16 %v511, %v508
      %v550 = vpack.c.bf16 %v519, %v516
      %v551 = vpack.c.bf16 %v527, %v524
      %v552 = vpack.c.bf16 %v535, %v532
      %v553 = vpack.c.bf16 %v543, %v540
      %v554 = vld [vmem:[%s339] sm:$0xf]
      %v556 = vsel %vm420, %v546, 0
      %v559 = vsel %vm420, %v547, 0
      %v562 = vsel %vm420, %v548, 0
      %v565 = vsel %vm420, %v549, 0
      %v568 = vsel %vm420, %v550, 0
      %v571 = vsel %vm420, %v551, 0
      %v574 = vsel %vm420, %v552, 0
      %v577 = vsel %vm420, %v553, 0
      %v580 = vsel %vm445, %v554, 0
      %582 = vmatprep.subr.bf16.mxu0 0
      %583 = vmatpush1.bf16.msra.mxu0 %v580
      %584 = vmatprep.subr.bf16.mxu0 0
      %585 = vmatpush1.bf16.msra.mxu0 0
      %586 = vmatprep.subr.bf16.mxu0 0
      %587 = vmatpush1.bf16.msra.mxu0 0
      %588 = vmatprep.subr.bf16.mxu0 0
      %589 = vmatpush1.bf16.msra.mxu0 0
      %590 = vmatprep.subr.bf16.mxu0 0
      %591 = vmatpush1.bf16.msra.mxu0 0
      %592 = vmatprep.subr.bf16.mxu0 0
      %593 = vmatpush1.bf16.msra.mxu0 0
      %594 = vmatprep.subr.bf16.mxu0 0
      %595 = vmatpush1.bf16.msra.mxu0 0
      %596 = vmatprep.subr.bf16.mxu0 0
      %597 = vmatpush1.bf16.msra.mxu0 0
      %598 = vmatprep.subr.bf16.mxu0 0
      %599 = vmatpush1.bf16.msra.mxu0 0
      %600 = vmatprep.subr.bf16.mxu0 0
      %601 = vmatpush1.bf16.msra.mxu0 0
      %602 = vmatprep.subr.bf16.mxu0 0
      %603 = vmatpush1.bf16.msra.mxu0 0
      %604 = vmatprep.subr.bf16.mxu0 0
      %605 = vmatpush1.bf16.msra.mxu0 0
      %606 = vmatprep.subr.bf16.mxu0 0
      %607 = vmatpush1.bf16.msra.mxu0 0
      %608 = vmatprep.subr.bf16.mxu0 0
      %609 = vmatpush1.bf16.msra.mxu0 0
      %610 = vmatprep.subr.bf16.mxu0 0
      %611 = vmatpush1.bf16.msra.mxu0 0
      %612 = vmatprep.subr.bf16.mxu0 0
      %613 = vmatpush1.bf16.msra.mxu0 0
      %614 = vmatprep.mubr.bf16.mxu0 0
      %615 = vmatmul.mubr.bf16.gmra.mrb[0].mxu0 %v556
      %v616 = vpop.f32.mrb[0].mxu0
      %v617 = vadd.f32 0.0, %v616
      %v618 = vpop.f32.mrb[0].mxu0
      %v619 = vpop.f32.mrb[0].mxu0
      %v620 = vadd.f32 0.0, %v619
      %v621 = vpop.f32.mrb[0].mxu0
      %622 = vmatprep.mubr.bf16.mxu0 0
      %623 = vmatmul.mubr.bf16.gmra.mrb[0].mxu0 %v559
      %v624 = vpop.f32.mrb[0].mxu0
      %v625 = vadd.f32 0.0, %v624
      %v626 = vpop.f32.mrb[0].mxu0
      %v627 = vpop.f32.mrb[0].mxu0
      %v628 = vadd.f32 0.0, %v627
      %v629 = vpop.f32.mrb[0].mxu0
      %630 = vmatprep.mubr.bf16.mxu0 0
      %631 = vmatmul.mubr.bf16.gmra.mrb[0].mxu0 %v562
      %v632 = vpop.f32.mrb[0].mxu0
      %v633 = vadd.f32 0.0, %v632
      %v634 = vpop.f32.mrb[0].mxu0
      %v635 = vpop.f32.mrb[0].mxu0
      %v636 = vadd.f32 0.0, %v635
      %v637 = vpop.f32.mrb[0].mxu0
      %638 = vmatprep.mubr.bf16.mxu0 0
      %639 = vmatmul.mubr.bf16.gmra.mrb[0].mxu0 %v565
      %v640 = vpop.f32.mrb[0].mxu0
      %v641 = vadd.f32 0.0, %v640
      %v642 = vpop.f32.mrb[0].mxu0
      %v643 = vpop.f32.mrb[0].mxu0
      %v644 = vadd.f32 0.0, %v643
      %v645 = vpop.f32.mrb[0].mxu0
      %646 = vmatprep.mubr.bf16.mxu0 0
      %647 = vmatmul.mubr.bf16.gmra.mrb[0].mxu0 %v568
      %v648 = vpop.f32.mrb[0].mxu0
      %v649 = vadd.f32 0.0, %v648
      %v650 = vpop.f32.mrb[0].mxu0
      %v651 = vpop.f32.mrb[0].mxu0
      %v652 = vadd.f32 0.0, %v651
      %v653 = vpop.f32.mrb[0].mxu0
      %654 = vmatprep.mubr.bf16.mxu0 0
      %655 = vmatmul.mubr.bf16.gmra.mrb[0].mxu0 %v571
      %v656 = vpop.f32.mrb[0].mxu0
      %v657 = vadd.f32 0.0, %v656
      %v658 = vpop.f32.mrb[0].mxu0
      %v659 = vpop.f32.mrb[0].mxu0
      %v660 = vadd.f32 0.0, %v659
      %v661 = vpop.f32.mrb[0].mxu0
      %662 = vmatprep.mubr.bf16.mxu0 0
      %663 = vmatmul.mubr.bf16.gmra.mrb[0].mxu0 %v574
      %v664 = vpop.f32.mrb[0].mxu0
      %v665 = vadd.f32 0.0, %v664
      %v666 = vpop.f32.mrb[0].mxu0
      %v667 = vpop.f32.mrb[0].mxu0
      %v668 = vadd.f32 0.0, %v667
      %v669 = vpop.f32.mrb[0].mxu0
      %670 = vmatprep.mubr.bf16.mxu0 0
      %671 = vmatmul.mubr.bf16.gmra.mrb[0].mxu0 %v577
      %v672 = vpop.f32.mrb[0].mxu0
      %v673 = vadd.f32 0.0, %v672
      %v674 = vpop.f32.mrb[0].mxu0
      %v675 = vpop.f32.mrb[0].mxu0
      %v676 = vadd.f32 0.0, %v675
      %v677 = vpop.f32.mrb[0].mxu0
      %678 = vdwg.mxu0
      %v679 = vlaneseq
      %v680 = vand.u32 %v679, 127
      %vm681 = vcmp.lt.s32.totalorder %v680, 64
      %v682 = vsel %vm681, 1, 0
      %vm683 = vcmp.eq.s32.totalorder %v682, 1
      %v684 = vsel %vm683, %v617, -1e+30
      %v685 = vsel %vm683, %v620, -1e+30
      %v686 = vsel %vm683, %v625, -1e+30
      %v687 = vsel %vm683, %v628, -1e+30
      %v688 = vsel %vm683, %v633, -1e+30
      %v689 = vsel %vm683, %v636, -1e+30
      %v690 = vsel %vm683, %v641, -1e+30
      %v691 = vsel %vm683, %v644, -1e+30
      %v692 = vsel %vm683, %v649, -1e+30
      %v693 = vsel %vm683, %v652, -1e+30
      %v694 = vsel %vm683, %v657, -1e+30
      %v695 = vsel %vm683, %v660, -1e+30
      %v696 = vsel %vm683, %v665, -1e+30
      %v697 = vsel %vm683, %v668, -1e+30
      %v698 = vsel %vm683, %v673, -1e+30
      %v699 = vsel %vm683, %v676, -1e+30
      %700 = vmax.xlane.f32.xlu0 %v684
      %v701 = vpop.xlane.xlu0 %700
      %702 = vmax.xlane.f32.xlu0 %v685
      %v703 = vpop.xlane.xlu0 %702
      %704 = vmax.xlane.f32.xlu0 %v686
      %v705 = vpop.xlane.xlu0 %704
      %706 = vmax.xlane.f32.xlu0 %v687
      %v707 = vpop.xlane.xlu0 %706
      %708 = vmax.xlane.f32.xlu0 %v688
      %v709 = vpop.xlane.xlu0 %708
      %710 = vmax.xlane.f32.xlu0 %v689
      %v711 = vpop.xlane.xlu0 %710
      %712 = vmax.xlane.f32.xlu0 %v690
      %v713 = vpop.xlane.xlu0 %712
      %714 = vmax.xlane.f32.xlu0 %v691
      %v715 = vpop.xlane.xlu0 %714
      %716 = vmax.xlane.f32.xlu0 %v692
      %v717 = vpop.xlane.xlu0 %716
      %718 = vmax.xlane.f32.xlu0 %v693
      %v719 = vpop.xlane.xlu0 %718
      %720 = vmax.xlane.f32.xlu0 %v694
      %v721 = vpop.xlane.xlu0 %720
      %722 = vmax.xlane.f32.xlu0 %v695
      %v723 = vpop.xlane.xlu0 %722
      %724 = vmax.xlane.f32.xlu0 %v696
      %v725 = vpop.xlane.xlu0 %724
      %726 = vmax.xlane.f32.xlu0 %v697
      %v727 = vpop.xlane.xlu0 %726
      %728 = vmax.xlane.f32.xlu0 %v698
      %v729 = vpop.xlane.xlu0 %728
      %730 = vmax.xlane.f32.xlu0 %v699
      %v731 = vpop.xlane.xlu0 %730
      %v732 = vsub.f32 %v684, %v701
      %v733 = vsub.f32 %v685, %v703
      %v734 = vsub.f32 %v686, %v705
      %v735 = vsub.f32 %v687, %v707
      %v736 = vsub.f32 %v688, %v709
      %v737 = vsub.f32 %v689, %v711
      %v738 = vsub.f32 %v690, %v713
      %v739 = vsub.f32 %v691, %v715
      %v740 = vsub.f32 %v692, %v717
      %v741 = vsub.f32 %v693, %v719
      %v742 = vsub.f32 %v694, %v721
      %v743 = vsub.f32 %v695, %v723
      %v744 = vsub.f32 %v696, %v725
      %v745 = vsub.f32 %v697, %v727
      %v746 = vsub.f32 %v698, %v729
      %v747 = vsub.f32 %v699, %v731
      %v748 = vpack.c.bf16 %v733, %v732
      %v749 = vpack.c.bf16 %v735, %v734
      %v750 = vpack.c.bf16 %v737, %v736
      %v751 = vpack.c.bf16 %v739, %v738
      %v752 = vpack.c.bf16 %v741, %v740
      %v753 = vpack.c.bf16 %v743, %v742
      %v754 = vpack.c.bf16 %v745, %v744
      %v755 = vpack.c.bf16 %v747, %v746
      %v757 = vmul.bf16 %v748, 1069105081
      %v758 = vpow.bf16.pop %v757
      %v760 = vmul.bf16 %v749, 1069105081
      %v761 = vpow.bf16.pop %v760
      %v763 = vmul.bf16 %v750, 1069105081
      %v764 = vpow.bf16.pop %v763
      %v766 = vmul.bf16 %v751, 1069105081
      %v767 = vpow.bf16.pop %v766
      %v769 = vmul.bf16 %v752, 1069105081
      %v770 = vpow.bf16.pop %v769
      %v772 = vmul.bf16 %v753, 1069105081
      %v773 = vpow.bf16.pop %v772
      %v775 = vmul.bf16 %v754, 1069105081
      %v776 = vpow.bf16.pop %v775
      %v778 = vmul.bf16 %v755, 1069105081
      %v779 = vpow.bf16.pop %v778
      %v780 = vunpack.c.l.bf16 %v758
      %v781 = vunpack.c.h.bf16 %v758
      %v782 = vunpack.c.l.bf16 %v761
      %v783 = vunpack.c.h.bf16 %v761
      %v784 = vunpack.c.l.bf16 %v764
      %v785 = vunpack.c.h.bf16 %v764
      %v786 = vunpack.c.l.bf16 %v767
      %v787 = vunpack.c.h.bf16 %v767
      %v788 = vunpack.c.l.bf16 %v770
      %v789 = vunpack.c.h.bf16 %v770
      %v790 = vunpack.c.l.bf16 %v773
      %v791 = vunpack.c.h.bf16 %v773
      %v792 = vunpack.c.l.bf16 %v776
      %v793 = vunpack.c.h.bf16 %v776
      %v794 = vunpack.c.l.bf16 %v779
      %v795 = vunpack.c.h.bf16 %v779
      %796 = vadd.xlane.f32.xlu0 %v780
      %v797 = vpop.xlane.xlu0 %796
      %798 = vadd.xlane.f32.xlu0 %v781
      %v799 = vpop.xlane.xlu0 %798
      %800 = vadd.xlane.f32.xlu0 %v782
      %v801 = vpop.xlane.xlu0 %800
      %802 = vadd.xlane.f32.xlu0 %v783
      %v803 = vpop.xlane.xlu0 %802
      %804 = vadd.xlane.f32.xlu0 %v784
      %v805 = vpop.xlane.xlu0 %804
      %806 = vadd.xlane.f32.xlu0 %v785
      %v807 = vpop.xlane.xlu0 %806
      %808 = vadd.xlane.f32.xlu0 %v786
      %v809 = vpop.xlane.xlu0 %808
      %810 = vadd.xlane.f32.xlu0 %v787
      %v811 = vpop.xlane.xlu0 %810
      %812 = vadd.xlane.f32.xlu0 %v788
      %v813 = vpop.xlane.xlu0 %812
      %814 = vadd.xlane.f32.xlu0 %v789
      %v815 = vpop.xlane.xlu0 %814
      %816 = vadd.xlane.f32.xlu0 %v790
      %v817 = vpop.xlane.xlu0 %816
      %818 = vadd.xlane.f32.xlu0 %v791
      %v819 = vpop.xlane.xlu0 %818
      %820 = vadd.xlane.f32.xlu0 %v792
      %v821 = vpop.xlane.xlu0 %820
      %822 = vadd.xlane.f32.xlu0 %v793
      %v823 = vpop.xlane.xlu0 %822
      %824 = vadd.xlane.f32.xlu0 %v794
      %v825 = vpop.xlane.xlu0 %824
      %826 = vadd.xlane.f32.xlu0 %v795
      %v827 = vpop.xlane.xlu0 %826
      %v828 = vld [vmem:[%s344] sm:$0xf]
      %v829 = vld [vmem:[%s344 + $0x4] sm:$0xf]
      %v830 = vld [vmem:[%s344 + $0x8] sm:$0xf]
      %v831 = vld [vmem:[%s344 + $0xc] sm:$0xf]
      %v832 = vld [vmem:[%s344 + $0x10] sm:$0xf]
      %v833 = vld [vmem:[%s344 + $0x14] sm:$0xf]
      %v834 = vld [vmem:[%s344 + $0x18] sm:$0xf]
      %v835 = vld [vmem:[%s344 + $0x1c] sm:$0xf]
      %v836 = vld [vmem:[%s344 + $0x20] sm:$0xf]
      %v837 = vld [vmem:[%s344 + $0x24] sm:$0xf]
      %v838 = vld [vmem:[%s344 + $0x28] sm:$0xf]
      %v839 = vld [vmem:[%s344 + $0x2c] sm:$0xf]
      %v840 = vld [vmem:[%s344 + $0x30] sm:$0xf]
      %v841 = vld [vmem:[%s344 + $0x34] sm:$0xf]
      %v842 = vld [vmem:[%s344 + $0x38] sm:$0xf]
      %v843 = vld [vmem:[%s344 + $0x3c] sm:$0xf]
      %v860 = vunpack.c.l.b16 %v828
      %v861 = vunpack.c.l.b16 %v829
      %v862 = vunpack.c.l.b16 %v830
      %v863 = vunpack.c.l.b16 %v831
      %v864 = vunpack.c.l.b16 %v832
      %v865 = vunpack.c.l.b16 %v833
      %v866 = vunpack.c.l.b16 %v834
      %v867 = vunpack.c.l.b16 %v835
      %v868 = vunpack.c.l.b16 %v836
      %v869 = vunpack.c.l.b16 %v837
      %v870 = vunpack.c.l.b16 %v838
      %v871 = vunpack.c.l.b16 %v839
      %v872 = vunpack.c.l.b16 %v840
      %v873 = vunpack.c.l.b16 %v841
      %v874 = vunpack.c.l.b16 %v842
      %v875 = vunpack.c.l.b16 %v843
      %v876 = vpack.c.b16 %v861, %v860
      %v877 = vpack.c.b16 %v863, %v862
      %v878 = vpack.c.b16 %v865, %v864
      %v879 = vpack.c.b16 %v867, %v866
      %v880 = vpack.c.b16 %v869, %v868
      %v881 = vpack.c.b16 %v871, %v870
      %v882 = vpack.c.b16 %v873, %v872
      %v883 = vpack.c.b16 %v875, %v874
      %892 = vmatprep.subr.bf16.mxu0 0
      %893 = vmatpush1.bf16.msra.mxu0 %v876
      %894 = vmatprep.subr.bf16.mxu0 0
      %895 = vmatpush1.bf16.msra.mxu0 %v877
      %896 = vmatprep.subr.bf16.mxu0 0
      %897 = vmatpush1.bf16.msra.mxu0 %v878
      %898 = vmatprep.subr.bf16.mxu0 0
      %899 = vmatpush1.bf16.msra.mxu0 %v879
      %900 = vmatprep.subr.bf16.mxu0 0
      %901 = vmatpush1.bf16.msra.mxu0 %v880
      %902 = vmatprep.subr.bf16.mxu0 0
      %903 = vmatpush1.bf16.msra.mxu0 %v881
      %904 = vmatprep.subr.bf16.mxu0 0
      %905 = vmatpush1.bf16.msra.mxu0 %v882
      %906 = vmatprep.subr.bf16.mxu0 0
      %907 = vmatpush1.bf16.msra.mxu0 %v883
      %908 = vmatprep.subr.bf16.mxu0 0
      %909 = vmatpush1.bf16.msra.mxu0 0
      %910 = vmatprep.subr.bf16.mxu0 0
      %911 = vmatpush1.bf16.msra.mxu0 0
      %912 = vmatprep.subr.bf16.mxu0 0
      %913 = vmatpush1.bf16.msra.mxu0 0
      %914 = vmatprep.subr.bf16.mxu0 0
      %915 = vmatpush1.bf16.msra.mxu0 0
      %916 = vmatprep.subr.bf16.mxu0 0
      %917 = vmatpush1.bf16.msra.mxu0 0
      %918 = vmatprep.subr.bf16.mxu0 0
      %919 = vmatpush1.bf16.msra.mxu0 0
      %920 = vmatprep.subr.bf16.mxu0 0
      %921 = vmatpush1.bf16.msra.mxu0 0
      %922 = vmatprep.subr.bf16.mxu0 0
      %923 = vmatpush1.bf16.msra.mxu0 0
      %924 = vmatprep.mubr.bf16.mxu0 0
      %925 = vmatmul.mubr.bf16.gmra.mrb[0].mxu0 %v758
      %v926 = vpop.f32.mrb[0].mxu0
      %v927 = vadd.f32 0.0, %v926
      %v928 = vpop.f32.mrb[0].mxu0
      %v929 = vpop.f32.mrb[0].mxu0
      %v930 = vadd.f32 0.0, %v929
      %v931 = vpop.f32.mrb[0].mxu0
      %932 = vmatprep.mubr.bf16.mxu0 0
      %933 = vmatmul.mubr.bf16.gmra.mrb[0].mxu0 %v761
      %v934 = vpop.f32.mrb[0].mxu0
      %v935 = vadd.f32 0.0, %v934
      %v936 = vpop.f32.mrb[0].mxu0
      %v937 = vpop.f32.mrb[0].mxu0
      %v938 = vadd.f32 0.0, %v937
      %v939 = vpop.f32.mrb[0].mxu0
      %940 = vmatprep.mubr.bf16.mxu0 0
      %941 = vmatmul.mubr.bf16.gmra.mrb[0].mxu0 %v764
      %v942 = vpop.f32.mrb[0].mxu0
      %v943 = vadd.f32 0.0, %v942
      %v944 = vpop.f32.mrb[0].mxu0
      %v945 = vpop.f32.mrb[0].mxu0
      %v946 = vadd.f32 0.0, %v945
      %v947 = vpop.f32.mrb[0].mxu0
      %948 = vmatprep.mubr.bf16.mxu0 0
      %949 = vmatmul.mubr.bf16.gmra.mrb[0].mxu0 %v767
      %v950 = vpop.f32.mrb[0].mxu0
      %v951 = vadd.f32 0.0, %v950
      %v952 = vpop.f32.mrb[0].mxu0
      %v953 = vpop.f32.mrb[0].mxu0
      %v954 = vadd.f32 0.0, %v953
      %v955 = vpop.f32.mrb[0].mxu0
      %956 = vmatprep.mubr.bf16.mxu0 0
      %957 = vmatmul.mubr.bf16.gmra.mrb[0].mxu0 %v770
      %v958 = vpop.f32.mrb[0].mxu0
      %v959 = vadd.f32 0.0, %v958
      %v960 = vpop.f32.mrb[0].mxu0
      %v961 = vpop.f32.mrb[0].mxu0
      %v962 = vadd.f32 0.0, %v961
      %v963 = vpop.f32.mrb[0].mxu0
      %964 = vmatprep.mubr.bf16.mxu0 0
      %965 = vmatmul.mubr.bf16.gmra.mrb[0].mxu0 %v773
      %v966 = vpop.f32.mrb[0].mxu0
      %v967 = vadd.f32 0.0, %v966
      %v968 = vpop.f32.mrb[0].mxu0
      %v969 = vpop.f32.mrb[0].mxu0
      %v970 = vadd.f32 0.0, %v969
      %v971 = vpop.f32.mrb[0].mxu0
      %972 = vmatprep.mubr.bf16.mxu0 0
      %973 = vmatmul.mubr.bf16.gmra.mrb[0].mxu0 %v776
      %v974 = vpop.f32.mrb[0].mxu0
      %v975 = vadd.f32 0.0, %v974
      %v976 = vpop.f32.mrb[0].mxu0
      %v977 = vpop.f32.mrb[0].mxu0
      %v978 = vadd.f32 0.0, %v977
      %v979 = vpop.f32.mrb[0].mxu0
      %980 = vmatprep.mubr.bf16.mxu0 0
      %981 = vmatmul.mubr.bf16.gmra.mrb[0].mxu0 %v779
      %v982 = vpop.f32.mrb[0].mxu0
      %v983 = vadd.f32 0.0, %v982
      %v984 = vpop.f32.mrb[0].mxu0
      %v985 = vpop.f32.mrb[0].mxu0
      %v986 = vadd.f32 0.0, %v985
      %v987 = vpop.f32.mrb[0].mxu0
      %988 = vdwg.mxu0
      %v989 = vrcp.pop %v797
      %v990 = vrcp.pop %v799
      %v991 = vrcp.pop %v801
      %v992 = vrcp.pop %v803
      %v993 = vrcp.pop %v805
      %v994 = vrcp.pop %v807
      %v995 = vrcp.pop %v809
      %v996 = vrcp.pop %v811
      %v997 = vrcp.pop %v813
      %v998 = vrcp.pop %v815
      %v999 = vrcp.pop %v817
      %v1000 = vrcp.pop %v819
      %v1001 = vrcp.pop %v821
      %v1002 = vrcp.pop %v823
      %v1003 = vrcp.pop %v825
      %v1004 = vrcp.pop %v827
      %v1005 = vmul.f32 %v927, %v989
      %v1006 = vmul.f32 %v930, %v990
      %v1007 = vmul.f32 %v935, %v991
      %v1008 = vmul.f32 %v938, %v992
      %v1009 = vmul.f32 %v943, %v993
      %v1010 = vmul.f32 %v946, %v994
      %v1011 = vmul.f32 %v951, %v995
      %v1012 = vmul.f32 %v954, %v996
      %v1013 = vmul.f32 %v959, %v997
      %v1014 = vmul.f32 %v962, %v998
      %v1015 = vmul.f32 %v967, %v999
      %v1016 = vmul.f32 %v970, %v1000
      %v1017 = vmul.f32 %v975, %v1001
      %v1018 = vmul.f32 %v978, %v1002
      %v1019 = vmul.f32 %v983, %v1003
      %v1020 = vmul.f32 %v986, %v1004
      %v1021 = vpack.c.bf16 %v1006, %v1005
      %v1022 = vpack.c.bf16 %v1008, %v1007
      %v1023 = vpack.c.bf16 %v1010, %v1009
      %v1024 = vpack.c.bf16 %v1012, %v1011
      %v1025 = vpack.c.bf16 %v1014, %v1013
      %v1026 = vpack.c.bf16 %v1016, %v1015
      %v1027 = vpack.c.bf16 %v1018, %v1017
      %v1028 = vpack.c.bf16 %v1020, %v1019
      %v1029 = vld [vmem:[%s5] sm:$0xf]
      %v1030 = vld [vmem:[%s6] sm:$0x1]
      %v1032 = vlaneseq
      %v1033 = vshrl.u32 %v1032, 7
      %v1034 = vsub.s32 0, %v1033
      %v1035 = vrot.slane %v1030, %v1034
      %v1038 = vsel %vm420, %v1021, 0
      %v1041 = vsel %vm420, %v1022, 0
      %v1044 = vsel %vm420, %v1023, 0
      %v1047 = vsel %vm420, %v1024, 0
      %v1050 = vsel %vm420, %v1025, 0
      %v1053 = vsel %vm420, %v1026, 0
      %v1056 = vsel %vm420, %v1027, 0
      %v1059 = vsel %vm420, %v1028, 0
      %v1062 = vsel %vm445, %v1029, 0
      %1064 = vmatprep.subr.bf16.mxu0 0
      %1065 = vmatpush1.bf16.msra.mxu0 %v1062
      %1066 = vmatprep.subr.bf16.mxu0 0
      %1067 = vmatpush1.bf16.msra.mxu0 0
      %1068 = vmatprep.subr.bf16.mxu0 0
      %1069 = vmatpush1.bf16.msra.mxu0 0
      %1070 = vmatprep.subr.bf16.mxu0 0
      %1071 = vmatpush1.bf16.msra.mxu0 0
      %1072 = vmatprep.subr.bf16.mxu0 0
      %1073 = vmatpush1.bf16.msra.mxu0 0
      %1074 = vmatprep.subr.bf16.mxu0 0
      %1075 = vmatpush1.bf16.msra.mxu0 0
      %1076 = vmatprep.subr.bf16.mxu0 0
      %1077 = vmatpush1.bf16.msra.mxu0 0
      %1078 = vmatprep.subr.bf16.mxu0 0
      %1079 = vmatpush1.bf16.msra.mxu0 0
      %1080 = vmatprep.subr.bf16.mxu0 0
      %1081 = vmatpush1.bf16.msra.mxu0 0
      %1082 = vmatprep.subr.bf16.mxu0 0
      %1083 = vmatpush1.bf16.msra.mxu0 0
      %1084 = vmatprep.subr.bf16.mxu0 0
      %1085 = vmatpush1.bf16.msra.mxu0 0
      %1086 = vmatprep.subr.bf16.mxu0 0
      %1087 = vmatpush1.bf16.msra.mxu0 0
      %1088 = vmatprep.subr.bf16.mxu0 0
      %1089 = vmatpush1.bf16.msra.mxu0 0
      %1090 = vmatprep.subr.bf16.mxu0 0
      %1091 = vmatpush1.bf16.msra.mxu0 0
      %1092 = vmatprep.subr.bf16.mxu0 0
      %1093 = vmatpush1.bf16.msra.mxu0 0
      %1094 = vmatprep.subr.bf16.mxu0 0
      %1095 = vmatpush1.bf16.msra.mxu0 0
      %1096 = vmatprep.mubr.bf16.mxu0 0
      %1097 = vmatmul.mubr.bf16.gmra.mrb[0].mxu0 %v1038
      %v1098 = vpop.f32.mrb[0].mxu0
      %v1099 = vadd.f32 %v1035, %v1098
      %v1100 = vpop.f32.mrb[0].mxu0
      %v1101 = vpop.f32.mrb[0].mxu0
      %v1102 = vadd.f32 %v1035, %v1101
      %v1103 = vpop.f32.mrb[0].mxu0
      %1104 = vmatprep.mubr.bf16.mxu0 0
      %1105 = vmatmul.mubr.bf16.gmra.mrb[0].mxu0 %v1041
      %v1106 = vpop.f32.mrb[0].mxu0
      %v1107 = vadd.f32 %v1035, %v1106
      %v1108 = vpop.f32.mrb[0].mxu0
      %v1109 = vpop.f32.mrb[0].mxu0
      %v1110 = vadd.f32 %v1035, %v1109
      %v1111 = vpop.f32.mrb[0].mxu0
      %1112 = vmatprep.mubr.bf16.mxu0 0
      %1113 = vmatmul.mubr.bf16.gmra.mrb[0].mxu0 %v1044
      %v1114 = vpop.f32.mrb[0].mxu0
      %v1115 = vadd.f32 %v1035, %v1114
      %v1116 = vpop.f32.mrb[0].mxu0
      %v1117 = vpop.f32.mrb[0].mxu0
      %v1118 = vadd.f32 %v1035, %v1117
      %v1119 = vpop.f32.mrb[0].mxu0
      %1120 = vmatprep.mubr.bf16.mxu0 0
      %1121 = vmatmul.mubr.bf16.gmra.mrb[0].mxu0 %v1047
      %v1122 = vpop.f32.mrb[0].mxu0
      %v1123 = vadd.f32 %v1035, %v1122
      %v1124 = vpop.f32.mrb[0].mxu0
      %v1125 = vpop.f32.mrb[0].mxu0
      %v1126 = vadd.f32 %v1035, %v1125
      %v1127 = vpop.f32.mrb[0].mxu0
      %1128 = vmatprep.mubr.bf16.mxu0 0
      %1129 = vmatmul.mubr.bf16.gmra.mrb[0].mxu0 %v1050
      %v1130 = vpop.f32.mrb[0].mxu0
      %v1131 = vadd.f32 %v1035, %v1130
      %v1132 = vpop.f32.mrb[0].mxu0
      %v1133 = vpop.f32.mrb[0].mxu0
      %v1134 = vadd.f32 %v1035, %v1133
      %v1135 = vpop.f32.mrb[0].mxu0
      %1136 = vmatprep.mubr.bf16.mxu0 0
      %1137 = vmatmul.mubr.bf16.gmra.mrb[0].mxu0 %v1053
      %v1138 = vpop.f32.mrb[0].mxu0
      %v1139 = vadd.f32 %v1035, %v1138
      %v1140 = vpop.f32.mrb[0].mxu0
      %v1141 = vpop.f32.mrb[0].mxu0
      %v1142 = vadd.f32 %v1035, %v1141
      %v1143 = vpop.f32.mrb[0].mxu0
      %1144 = vmatprep.mubr.bf16.mxu0 0
      %1145 = vmatmul.mubr.bf16.gmra.mrb[0].mxu0 %v1056
      %v1146 = vpop.f32.mrb[0].mxu0
      %v1147 = vadd.f32 %v1035, %v1146
      %v1148 = vpop.f32.mrb[0].mxu0
      %v1149 = vpop.f32.mrb[0].mxu0
      %v1150 = vadd.f32 %v1035, %v1149
      %v1151 = vpop.f32.mrb[0].mxu0
      %1152 = vmatprep.mubr.bf16.mxu0 0
      %1153 = vmatmul.mubr.bf16.gmra.mrb[0].mxu0 %v1059
      %v1154 = vpop.f32.mrb[0].mxu0
      %v1155 = vadd.f32 %v1035, %v1154
      %v1156 = vpop.f32.mrb[0].mxu0
      %v1157 = vpop.f32.mrb[0].mxu0
      %v1158 = vadd.f32 %v1035, %v1157
      %v1159 = vpop.f32.mrb[0].mxu0
      %1160 = vdwg.mxu0
      %v1161 = vunpack.c.l.bf16 %v356
      %v1162 = vunpack.c.l.bf16 %v357
      %v1163 = vunpack.c.l.bf16 %v358
      %v1164 = vunpack.c.l.bf16 %v359
      %v1165 = vunpack.c.l.bf16 %v360
      %v1166 = vunpack.c.l.bf16 %v361
      %v1167 = vunpack.c.l.bf16 %v362
      %v1168 = vunpack.c.l.bf16 %v363
      %v1169 = vunpack.c.l.bf16 %v364
      %v1170 = vunpack.c.l.bf16 %v365
      %v1171 = vunpack.c.l.bf16 %v366
      %v1172 = vunpack.c.l.bf16 %v367
      %v1173 = vunpack.c.l.bf16 %v368
      %v1174 = vunpack.c.l.bf16 %v369
      %v1175 = vunpack.c.l.bf16 %v370
      %v1176 = vunpack.c.l.bf16 %v371
      %v1177 = vadd.f32 %v1099, %v1161
      %v1178 = vadd.f32 %v1102, %v1162
      %v1179 = vadd.f32 %v1107, %v1163
      %v1180 = vadd.f32 %v1110, %v1164
      %v1181 = vadd.f32 %v1115, %v1165
      %v1182 = vadd.f32 %v1118, %v1166
      %v1183 = vadd.f32 %v1123, %v1167
      %v1184 = vadd.f32 %v1126, %v1168
      %v1185 = vadd.f32 %v1131, %v1169
      %v1186 = vadd.f32 %v1134, %v1170
      %v1187 = vadd.f32 %v1139, %v1171
      %v1188 = vadd.f32 %v1142, %v1172
      %v1189 = vadd.f32 %v1147, %v1173
      %v1190 = vadd.f32 %v1150, %v1174
      %v1191 = vadd.f32 %v1155, %v1175
      %v1192 = vadd.f32 %v1158, %v1176
      %1193 = vst.msk [vmem:[%s353] sm:$0xff] %vm420, %v1177
      %1194 = vst.msk [vmem:[%s353 + $0x8] sm:$0xff] %vm420, %v1178
      %1195 = vst.msk [vmem:[%s353 + $0x10] sm:$0xff] %vm420, %v1179
      %1196 = vst.msk [vmem:[%s353 + $0x18] sm:$0xff] %vm420, %v1180
      %1197 = vst.msk [vmem:[%s353 + $0x20] sm:$0xff] %vm420, %v1181
      %1198 = vst.msk [vmem:[%s353 + $0x28] sm:$0xff] %vm420, %v1182
      %1199 = vst.msk [vmem:[%s353 + $0x30] sm:$0xff] %vm420, %v1183
      %1200 = vst.msk [vmem:[%s353 + $0x38] sm:$0xff] %vm420, %v1184
      %1201 = vst.msk [vmem:[%s353 + $0x40] sm:$0xff] %vm420, %v1185
      %1202 = vst.msk [vmem:[%s353 + $0x48] sm:$0xff] %vm420, %v1186
      %1203 = vst.msk [vmem:[%s353 + $0x50] sm:$0xff] %vm420, %v1187
      %1204 = vst.msk [vmem:[%s353 + $0x58] sm:$0xff] %vm420, %v1188
      %1205 = vst.msk [vmem:[%s353 + $0x60] sm:$0xff] %vm420, %v1189
      %1206 = vst.msk [vmem:[%s353 + $0x68] sm:$0xff] %vm420, %v1190
      %1207 = vst.msk [vmem:[%s353 + $0x70] sm:$0xff] %vm420, %v1191
      %1208 = vst.msk [vmem:[%s353 + $0x78] sm:$0xff] %vm420, %v1192
      %s1209 = smul.u32 16, %s23
      %p1210 = scmp.lt.s32.totalorder %s22, 1
      %s1211 = scalar_select %p1210, %s22, 1
      %p1212 = scmp.lt.s32.totalorder %s1209, 31
      %s1213 = scalar_select %p1212, %s1209, 31
      %s1214 = smul.addr %s1211, 32
      %s1215 = sadd.s32 %s1213, %s1214
      %s1216 = smul.addr %s1215, 8
      %s1217 = scalar_lea.vmem %s7, %s1216
      // Predicated region
      $region49: #{nonlocal_block.1} parent=47 // pred_check
        %p1218 = pneg %p214
      $region50: #{nonlocal_block.1} parent=47 // pred_check_branch
        %1220 = sbr.rel (%p1218) target = $region52
      $region51: #{nonlocal_block.1} parent=47 // pred_region
        %s1221 = smul.u32 16, %s23
      $region52: #{nonlocal_block.1} parent=47 // pred_fallthru
        _
    $region48: #{nonlocal_block.1} parent=5 // pred_fallthru
      _
    %p1222 = scmp.le.s32.totalorder 2, %s13
    // Predicated region
    $region53: #{nonlocal_block.1} parent=5 // pred_check
      %p1223 = pneg %p1222
    $region54: #{nonlocal_block.1} parent=5 // pred_check_branch
      %1225 = sbr.rel (%p1223) target = $region56
    $region55: #{nonlocal_block.1} parent=5 // pred_region
      %s1226 = ssub.s32 %s13, 2
      // Predicated region
      $region57: #{nonlocal_block.1} parent=55 // pred_check
        %p1227 = pneg %p220
      $region58: #{nonlocal_block.1} parent=55 // pred_check_branch
        %1229 = sbr.rel (%p1227) target = $region60
      $region59: #{nonlocal_block.1} parent=55 // pred_region
        %s1230 = smul.u32 16, %s25
        %p1231 = scmp.lt.s32.totalorder %s24, 1
        %s1232 = scalar_select %p1231, %s24, 1
        %p1233 = scmp.lt.s32.totalorder %s1230, 31
        %s1234 = scalar_select %p1233, %s1230, 31
        %s1235 = smul.addr %s1232, 32
        %s1236 = sadd.s32 %s1234, %s1235
        %s1237 = smul.addr %s1236, 8
        %s1238 = scalar_lea.vmem %s7, %s1237
      $region60: #{nonlocal_block.1} parent=55 // pred_fallthru
        _
    $region56: #{nonlocal_block.1} parent=5 // pred_fallthru
      _
  $region6: #{nonlocal_block.1} parent=0 // loop_footer
    %s17 = sadd.s32 1, %s13
  $region7: #{nonlocal_block.1} parent=0 // loop_footer_branch
    %12 = sbr.rel target = $region3
  $region8: #{nonlocal_block.1} parent=0 // loop_exit
    _

</llo_original>
